<compile_context>
chip_gen: v6e
topology: v6e:2x2x1
jax: 0.10.0
libtpu: 0.0.40
codegen_flags: <defaults>
</compile_context>

<pallas_src>
import jax
import jax.numpy as jnp
from jax.experimental import pallas as pl
from jax.experimental.pallas import tpu as pltpu

# Problem sizes (args.his_len = 8, args.embadding_size = 32, args.basis_list = [7])
L, E, B = 8, 32, 7
BP = 8                      # basis dim padded per embedding-channel group
EB = E * BP                 # 256: lane-dense Fourier-feature width
K_IN = 2 * L                # 16: flattened (l, k) history length
OUT_LANES = 128             # lane-dense output width (only lanes 0:2 meaningful)

# Row layout of the folded "embedding-side" parameter array p_emb (PE_ROWS, EB).
R_WBIG = 0                  # rows 0:16  -> W_big[(l,k), (e,b)] = Wemb[e,k] * Ws[b,l]
R_XC = 16                   # row 16     -> x_const[(e,b)] = bemb[e]*sum_l Ws[b,l] + bs[b]
R_OC = 17                   # row 17     -> out_const (lanes 0:2)
PE_ROWS = 24                # padded to a multiple of 8 sublanes


def net_motivation_kernel(h_ref, pe_ref, psin_ref, pcos_ref, o_ref):
    # h_ref: (tile, 16) flattened histories; pe_ref: (24, 256) resident;
    # psin_ref/pcos_ref: (256, 128) resident; o_ref: (tile, 128) lane-dense output.

    # Stage 1: all linear work up to the Fourier argument in one MXU matmul
    # (embedding + transpose + L_s folded into W_big; biases folded into x_const).
    x = jnp.dot(h_ref[...], pe_ref[R_WBIG:R_WBIG + K_IN, :],
                preferred_element_type=jnp.float32) \
        + pe_ref[R_XC:R_XC + 1, :]                                   # (tile, 256)

    # Stage 2: Fourier basis on dense lanes (EUP), then L_m + de-embedding folded
    # into two (256, 128) MXU matmuls; bm/bde folded into out_const.
    # Padded feature lanes have x == 0 and zero rows in psin/pcos -> contribute 0.
    out = jnp.dot(jnp.sin(x), psin_ref[...], preferred_element_type=jnp.float32) \
        + jnp.dot(jnp.cos(x), pcos_ref[...], preferred_element_type=jnp.float32) \
        + pe_ref[R_OC:R_OC + 1, 0:OUT_LANES]                         # (tile, 128)
    o_ref[...] = out


def pack_params(W_emb, b_emb, W_s, b_s, W_m, b_m, W_de, b_de):
    """Fold biases and factor the four Linear layers into three constant arrays."""
    wmsin = W_m[0, :B]                                   # (B,)
    wmcos = W_m[0, B:]                                   # (B,)
    bm = b_m[0]

    # x[e, b] = sum_{l,k} h[l,k] * Wemb[e,k] * Ws[b,l] + x_const[e,b]
    w_big = jnp.einsum('ek,bl->lkeb', W_emb, W_s)        # (L, 2, E, B)
    w_big = jnp.pad(w_big, ((0, 0), (0, 0), (0, 0), (0, BP - B))).reshape(K_IN, EB)
    x_const = b_emb[:, None] * W_s.sum(axis=1)[None, :] + b_s[None, :]   # (E, B)
    x_const = jnp.pad(x_const, ((0, 0), (0, BP - B))).reshape(EB)
    out_const = bm * W_de.sum(axis=1) + b_de                              # (2,)

    p_emb = jnp.zeros((PE_ROWS, EB), jnp.float32)
    p_emb = p_emb.at[R_WBIG:R_WBIG + K_IN, :].set(w_big)
    p_emb = p_emb.at[R_XC, :].set(x_const)
    p_emb = p_emb.at[R_OC, 0:2].set(out_const)

    # out[j] = sum_{e,b} sin(x)*(wmsin[b]*Wde[j,e]) + cos(x)*(wmcos[b]*Wde[j,e]) + out_const[j]
    w_sin = jnp.einsum('b,je->ebj', wmsin, W_de)          # (E, B, 2)
    w_sin = jnp.pad(w_sin, ((0, 0), (0, BP - B), (0, 0))).reshape(EB, 2)
    w_cos = jnp.einsum('b,je->ebj', wmcos, W_de)
    w_cos = jnp.pad(w_cos, ((0, 0), (0, BP - B), (0, 0))).reshape(EB, 2)

    p_sin = jnp.zeros((EB, OUT_LANES), jnp.float32).at[:, 0:2].set(w_sin)
    p_cos = jnp.zeros((EB, OUT_LANES), jnp.float32).at[:, 0:2].set(w_cos)
    return p_emb, p_sin, p_cos


def net_motivation_forward_batched(histories, p_emb, p_sin, p_cos, *, tile=8):
    """histories: (N, L, 2) -> (N, 2).  Each window is one independent forward pass."""
    N = histories.shape[0]
    n_pad = (-N) % tile
    if n_pad:
        histories = jnp.pad(histories, ((0, n_pad), (0, 0), (0, 0)))
    Np = N + n_pad
    h_flat = histories.reshape(Np, K_IN).astype(jnp.float32)   # row index = l*2 + k

    const = lambda i: (0, 0)   # constant block index -> params stay VMEM-resident
    out = pl.pallas_call(
        net_motivation_kernel,
        out_shape=jax.ShapeDtypeStruct((Np, OUT_LANES), jnp.float32),
        grid_spec=pltpu.PrefetchScalarGridSpec(
            num_scalar_prefetch=0,
            grid=(Np // tile,),
            in_specs=[
                pl.BlockSpec((tile, K_IN), lambda i: (i, 0)),      # streamed histories
                pl.BlockSpec((PE_ROWS, EB), const),                # resident params
                pl.BlockSpec((EB, OUT_LANES), const),
                pl.BlockSpec((EB, OUT_LANES), const),
            ],
            out_specs=pl.BlockSpec((tile, OUT_LANES), lambda i: (i, 0)),
        ),
        compiler_params=pltpu.CompilerParams(
            dimension_semantics=("parallel",)),                    # both TCs on v7x
        cost_estimate=pl.CostEstimate(
            flops=Np * (2 * K_IN * EB + 4 * EB * OUT_LANES),
            transcendentals=Np * 2 * EB,
            bytes_accessed=(PE_ROWS * EB + 2 * EB * OUT_LANES) * 4
                           + Np * (K_IN + OUT_LANES) * 4),
    )(h_flat, p_emb, p_sin, p_cos)
    return out[:N, :2]


def net_motivation_forward(history, p_emb, p_sin, p_cos):
    """Single window, matching the PyTorch forward: (L, 2) -> (1, 2)."""
    return net_motivation_forward_batched(history[None, :, :], p_emb, p_sin, p_cos)


def reference(history, W_emb, b_emb, W_s, b_s, W_m, b_m, W_de, b_de):
    """Pure-JAX reference mirroring the PyTorch forward exactly."""
    seq = history @ W_emb.T + b_emb                             # (L, E)
    seq_t = seq.T                                               # (E, L)
    x = seq_t @ W_s.T + b_s                                     # (E, B)
    feats = jnp.concatenate([jnp.sin(x), jnp.cos(x)], axis=-1)  # (E, 2B)
    y = feats @ W_m.T + b_m                                     # (E, 1)
    out = y.T @ W_de.T + b_de                                   # (1, 2)
    return out


if __name__ == "__main__":
    key = jax.random.PRNGKey(0)
    ks = jax.random.split(key, 9)

    def unif(k, shape, fan_in):
        bound = 1.0 / float(fan_in) ** 0.5
        return jax.random.uniform(k, shape, jnp.float32, -bound, bound)

    # PyTorch-convention parameter shapes (Linear: weight (out, in), bias (out,))
    W_emb = unif(ks[0], (E, 2), 2)
    b_emb = unif(ks[1], (E,), 2)
    W_s = unif(ks[2], (B, L), L)
    b_s = unif(ks[3], (B,), L)
    W_m = unif(ks[4], (1, 2 * B), 2 * B)
    b_m = unif(ks[5], (1,), 2 * B)
    W_de = unif(ks[6], (2, E), E)
    b_de = unif(ks[7], (2,), E)

    N = 16                                                # batched windows per call
    histories = jax.random.normal(ks[8], (N, L, 2), jnp.float32)

    p_emb, p_sin, p_cos = pack_params(W_emb, b_emb, W_s, b_s, W_m, b_m, W_de, b_de)

    # Batched path (the throughput path).
    out_b = jax.block_until_ready(
        net_motivation_forward_batched(histories, p_emb, p_sin, p_cos, tile=8))
    ref_b = jax.vmap(
        lambda h: reference(h, W_emb, b_emb, W_s, b_s, W_m, b_m, W_de, b_de)[0]
    )(histories)
    assert out_b.shape == (N, 2), out_b.shape
    assert jnp.allclose(out_b, ref_b, atol=3e-5, rtol=1e-5), (out_b, ref_b)

    # Single-window path (exact PyTorch forward semantics: (L,2) -> (1,2)).
    out_1 = jax.block_until_ready(
        net_motivation_forward(histories[0], p_emb, p_sin, p_cos))
    ref_1 = reference(histories[0], W_emb, b_emb, W_s, b_s, W_m, b_m, W_de, b_de)
    assert out_1.shape == (1, 2), out_1.shape
    assert jnp.allclose(out_1, ref_1, atol=3e-5, rtol=1e-5), (out_1, ref_1)

    print("KERNEL_OK")
</pallas_src>

<mosaic_0001>
module attributes {stable_mosaic.version = 11 : i64} {
  func.func @net_motivation_kernel(%arg0: i32, %arg1: memref<8x16xf32, #tpu.memory_space<vmem>>, %arg2: memref<24x256xf32, #tpu.memory_space<vmem>>, %arg3: memref<256x128xf32, #tpu.memory_space<vmem>>, %arg4: memref<256x128xf32, #tpu.memory_space<vmem>>, %arg5: memref<8x128xf32, #tpu.memory_space<vmem>>) attributes {dimension_semantics = [#tpu.dimension_semantics<parallel>], iteration_bounds = array<i64: 2>, scalar_prefetch = 0 : i64, scratch_operands = 0 : i64, tpu.core_type = #tpu.core_type<tc>, window_params = [{transform_indices = @transform_0, window_bounds = array<i64: 8, 16>}, {pipeline_mode = #tpu.pipeline_mode<synchronous>, transform_indices = @transform_1, window_bounds = array<i64: 24, 256>}, {pipeline_mode = #tpu.pipeline_mode<synchronous>, transform_indices = @transform_2, window_bounds = array<i64: 256, 128>}, {pipeline_mode = #tpu.pipeline_mode<synchronous>, transform_indices = @transform_3, window_bounds = array<i64: 256, 128>}, {transform_indices = @transform_4, window_bounds = array<i64: 8, 128>}]} {
    %c0 = arith.constant 0 : index
    %c0_0 = arith.constant 0 : index
    %0 = vector.load %arg1[%c0, %c0_0] : memref<8x16xf32, #tpu.memory_space<vmem>>, vector<8x16xf32>
    %c0_1 = arith.constant 0 : index
    %c0_2 = arith.constant 0 : index
    %1 = vector.load %arg2[%c0_1, %c0_2] : memref<24x256xf32, #tpu.memory_space<vmem>>, vector<16x256xf32>
    %cst = arith.constant dense<0.000000e+00> : vector<8x256xf32>
    %2 = tpu.matmul %0, %1, %cst {dimension_numbers = #tpu.dot_dimension_numbers<[1], [0], [0], [1], [0, 0, 1, 1], [], []>} : vector<8x16xf32>, vector<16x256xf32>, vector<8x256xf32> -> vector<8x256xf32>
    %c16 = arith.constant 16 : index
    %c0_3 = arith.constant 0 : index
    %3 = vector.load %arg2[%c16, %c0_3] : memref<24x256xf32, #tpu.memory_space<vmem>>, vector<1x256xf32>
    %4 = vector.broadcast %3 : vector<1x256xf32> to vector<8x256xf32>
    %5 = arith.addf %2, %4 : vector<8x256xf32>
    %6 = math.sin %5 : vector<8x256xf32>
    %c0_4 = arith.constant 0 : index
    %c0_5 = arith.constant 0 : index
    %7 = vector.load %arg3[%c0_4, %c0_5] : memref<256x128xf32, #tpu.memory_space<vmem>>, vector<256x128xf32>
    %cst_6 = arith.constant dense<0.000000e+00> : vector<8x128xf32>
    %8 = tpu.matmul %6, %7, %cst_6 {dimension_numbers = #tpu.dot_dimension_numbers<[1], [0], [0], [1], [0, 0, 1, 1], [], []>} : vector<8x256xf32>, vector<256x128xf32>, vector<8x128xf32> -> vector<8x128xf32>
    %9 = math.cos %5 : vector<8x256xf32>
    %c0_7 = arith.constant 0 : index
    %c0_8 = arith.constant 0 : index
    %10 = vector.load %arg4[%c0_7, %c0_8] : memref<256x128xf32, #tpu.memory_space<vmem>>, vector<256x128xf32>
    %cst_9 = arith.constant dense<0.000000e+00> : vector<8x128xf32>
    %11 = tpu.matmul %9, %10, %cst_9 {dimension_numbers = #tpu.dot_dimension_numbers<[1], [0], [0], [1], [0, 0, 1, 1], [], []>} : vector<8x256xf32>, vector<256x128xf32>, vector<8x128xf32> -> vector<8x128xf32>
    %12 = arith.addf %8, %11 : vector<8x128xf32>
    %c17 = arith.constant 17 : index
    %c0_10 = arith.constant 0 : index
    %13 = vector.load %arg2[%c17, %c0_10] : memref<24x256xf32, #tpu.memory_space<vmem>>, vector<1x128xf32>
    %14 = vector.broadcast %13 : vector<1x128xf32> to vector<8x128xf32>
    %15 = arith.addf %12, %14 : vector<8x128xf32>
    %c0_11 = arith.constant 0 : index
    %c0_12 = arith.constant 0 : index
    %16 = vector.load %arg5[%c0_11, %c0_12] : memref<8x128xf32, #tpu.memory_space<vmem>>, vector<8x128xf32>
    tpu.vector_store %arg5[%c0_11, %c0_12], %15 {strides = array<i32>} : memref<8x128xf32, #tpu.memory_space<vmem>>, vector<8x128xf32>,
    return
  }
  func.func @transform_0(%arg0: i32) -> (i32, i32) {
    %c0_i32 = arith.constant 0 : i32
    %c0_i32_0 = arith.constant 0 : i32
    return %arg0, %c0_i32 : i32, i32
  }
  func.func @transform_1(%arg0: i32) -> (i32, i32) {
    %c0_i32 = arith.constant 0 : i32
    %c0_i32_0 = arith.constant 0 : i32
    %c0_i32_1 = arith.constant 0 : i32
    return %c0_i32, %c0_i32_0 : i32, i32
  }
  func.func @transform_2(%arg0: i32) -> (i32, i32) {
    %c0_i32 = arith.constant 0 : i32
    %c0_i32_0 = arith.constant 0 : i32
    %c0_i32_1 = arith.constant 0 : i32
    return %c0_i32, %c0_i32_0 : i32, i32
  }
  func.func @transform_3(%arg0: i32) -> (i32, i32) {
    %c0_i32 = arith.constant 0 : i32
    %c0_i32_0 = arith.constant 0 : i32
    %c0_i32_1 = arith.constant 0 : i32
    return %c0_i32, %c0_i32_0 : i32, i32
  }
  func.func @transform_4(%arg0: i32) -> (i32, i32) {
    %c0_i32 = arith.constant 0 : i32
    %c0_i32_0 = arith.constant 0 : i32
    return %arg0, %c0_i32 : i32, i32
  }
}

</mosaic_0001>

<llo_original>
// kernel: tpu_custom_call.1
$region0: #{tpu_custom_call.1}
  #allocation0 [shape = 'u32[]', space=smem, size = 0x4, offset = 0x4, fixed_abs, tag = 'smem constant byte address 0x4 - core index']
  #allocation1 [shape = 'u32[144,128]{1,0:T(1,128)}', space=vmem, size = 0x12000, scoped, tag = 'internal scratch']
  %s0 = inlined_call_operand.hbm [shape: f32[16,16], index: 0, kind: input, shape index: {}]
  %s1 = inlined_call_operand.hbm [shape: f32[24,256], index: 1, kind: input, shape index: {}]
  %s2 = inlined_call_operand.hbm [shape: f32[256,128], index: 2, kind: input, shape index: {}]
  %s3 = inlined_call_operand.hbm [shape: f32[256,128], index: 3, kind: input, shape index: {}]
  %s4 = inlined_call_operand.hbm [shape: f32[16,128], index: 4, kind: output, shape index: {}]
  %s5 = sld [smem:[#allocation0]]
  $region65: #{tpu_custom_call.1} parent=0
    _
  %s7 = ssub.s32 1, %s5
  %s8 = scalar_select 0, %s7, %s5
  $region1: #{tpu_custom_call.1} parent=0
    #allocation2 [shape = 'u8[8192]{0}', space=vmem, size = 0x2000, scoped, tag = 'input window, operand 0']
    #allocation3 [shape = 's32[2]{0}', space=sflag, size = 0x8, scoped, tag = 'scoped memory for tpu_custom_call.1']
    #allocation4 [shape = 's32[2]{0}', space=sflag, size = 0x8, scoped, tag = 'scoped memory for tpu_custom_call.1']
    #allocation5 [shape = 'u8[24576]{0}', space=vmem, size = 0x6000, scoped, tag = 'input window, operand 1, single buffered']
    #allocation6 [shape = 's32[1]{0}', space=sflag, size = 0x4, scoped, tag = 'scoped memory for tpu_custom_call.1']
    #allocation7 [shape = 'u8[131072]{0}', space=vmem, size = 0x20000, scoped, tag = 'input window, operand 2, single buffered']
    #allocation8 [shape = 'u8[131072]{0}', space=vmem, size = 0x20000, scoped, tag = 'input window, operand 3, single buffered']
    #allocation9 [shape = 's32[1]{0}', space=sflag, size = 0x4, scoped, tag = 'scoped memory for tpu_custom_call.1']
    #allocation10 [shape = 'u8[8192]{0}', space=vmem, size = 0x2000, scoped, tag = 'output window, operand 0']
    %9 = vsyncpa [#allocation3], 0
    %s10 = scalar_lea.sflag [#allocation3], 1
    %11 = vsyncpa %s10, 0
    %12 = vsyncpa [#allocation6], 0
    %13 = vsyncpa [#allocation9], 0
    %14 = vsyncpa [#allocation4], 0
    %s15 = scalar_lea.sflag [#allocation4], 1
    %16 = vsyncpa %s15, 0
    loop: start=0, step=1, limit=4
    $region2: #{tpu_custom_call.1} parent=1 // loop_pre_header
      _
    $region3: #{tpu_custom_call.1} parent=1 // loop_header
      %s18 = sphi 0, %s22
      %p19 = scmp.ge.s32.totalorder %s18, 4
      %s28 = sphi 0, %s30
      %s31 = sphi 0, %s28
      %s32 = sphi 0, %s31
      %s48 = sphi 0, %s32
      %s52 = sphi 0, %s52
      %s54 = sphi 0, %s52
      %s55 = sphi 0, %s54
      %s69 = sphi 0, %s55
      %s73 = sphi 0, %s73
      %s75 = sphi 0, %s73
      %s76 = sphi 0, %s75
      %s90 = sphi 0, %s76
      %s94 = sphi 0, %s94
      %s96 = sphi 0, %s94
      %s97 = sphi 0, %s96
      %s111 = sphi 0, %s97
      %s117 = sphi 0, %s119
      %s120 = sphi 0, %s117
      %s121 = sphi 0, %s120
      %s137 = sphi 0, %s121
    $region4: #{tpu_custom_call.1} parent=1 // loop_header_branch
      %21 = sbr.rel (%p19) target = $region8
    $region5: #{tpu_custom_call.1} parent=1 // loop_body
      %s23 = ssub.s32 %s18, 1
      %s24 = ssub.s32 %s18, 2
      %s25 = sadd.s32 %s18, 1
      %s26 = ssub.s32 %s18, %s25
      %p27 = scmp.eq.s32.totalorder %s26, 0
      %s29 = sadd.s32 %s28, 1
      %s30 = scalar_select %p27, %s28, %s29
      %p33 = pneg %p27
      %p34 = scmp.eq.s32.totalorder %s18, 1
      %p35 = por %p33, %p34
      %p36 = scmp.ne.s32.totalorder %s28, %s31
      %p37 = scmp.eq.s32.totalorder %s18, 0
      %p38 = por %p36, %p37
      %p39 = scmp.ne.s32.totalorder %s28, %s31
      %p40 = scmp.eq.s32.totalorder %s23, 1
      %p41 = por %p39, %p40
      %p42 = scmp.ne.s32.totalorder %s31, %s32
      %p43 = scmp.eq.s32.totalorder %s23, 0
      %p44 = por %p42, %p43
      %p45 = scmp.ne.s32.totalorder %s31, %s32
      %p46 = scmp.eq.s32.totalorder %s24, 1
      %p47 = por %p45, %p46
      %p49 = scmp.ne.s32.totalorder %s32, %s48
      %p50 = scmp.eq.s32.totalorder %s24, 0
      %p51 = por %p49, %p50
      %s53 = sadd.s32 %s52, 1
      %p56 = scmp.eq.s32.totalorder %s18, 1
      %p57 = scmp.ne.s32.totalorder %s52, %s54
      %p58 = scmp.eq.s32.totalorder %s18, 0
      %p59 = por %p57, %p58
      %p60 = scmp.ne.s32.totalorder %s52, %s54
      %p61 = scmp.eq.s32.totalorder %s23, 1
      %p62 = por %p60, %p61
      %p63 = scmp.ne.s32.totalorder %s54, %s55
      %p64 = scmp.eq.s32.totalorder %s23, 0
      %p65 = por %p63, %p64
      %p66 = scmp.ne.s32.totalorder %s54, %s55
      %p67 = scmp.eq.s32.totalorder %s24, 1
      %p68 = por %p66, %p67
      %p70 = scmp.ne.s32.totalorder %s55, %s69
      %p71 = scmp.eq.s32.totalorder %s24, 0
      %p72 = por %p70, %p71
      %s74 = sadd.s32 %s73, 1
      %p77 = scmp.eq.s32.totalorder %s18, 1
      %p78 = scmp.ne.s32.totalorder %s73, %s75
      %p79 = scmp.eq.s32.totalorder %s18, 0
      %p80 = por %p78, %p79
      %p81 = scmp.ne.s32.totalorder %s73, %s75
      %p82 = scmp.eq.s32.totalorder %s23, 1
      %p83 = por %p81, %p82
      %p84 = scmp.ne.s32.totalorder %s75, %s76
      %p85 = scmp.eq.s32.totalorder %s23, 0
      %p86 = por %p84, %p85
      %p87 = scmp.ne.s32.totalorder %s75, %s76
      %p88 = scmp.eq.s32.totalorder %s24, 1
      %p89 = por %p87, %p88
      %p91 = scmp.ne.s32.totalorder %s76, %s90
      %p92 = scmp.eq.s32.totalorder %s24, 0
      %p93 = por %p91, %p92
      %s95 = sadd.s32 %s94, 1
      %p98 = scmp.eq.s32.totalorder %s18, 1
      %p99 = scmp.ne.s32.totalorder %s94, %s96
      %p100 = scmp.eq.s32.totalorder %s18, 0
      %p101 = por %p99, %p100
      %p102 = scmp.ne.s32.totalorder %s94, %s96
      %p103 = scmp.eq.s32.totalorder %s23, 1
      %p104 = por %p102, %p103
      %p105 = scmp.ne.s32.totalorder %s96, %s97
      %p106 = scmp.eq.s32.totalorder %s23, 0
      %p107 = por %p105, %p106
      %p108 = scmp.ne.s32.totalorder %s96, %s97
      %p109 = scmp.eq.s32.totalorder %s24, 1
      %p110 = por %p108, %p109
      %p112 = scmp.ne.s32.totalorder %s97, %s111
      %p113 = scmp.eq.s32.totalorder %s24, 0
      %p114 = por %p112, %p113
      %s115 = ssub.s32 %s18, %s25
      %p116 = scmp.eq.s32.totalorder %s115, 0
      %s118 = sadd.s32 %s117, 1
      %s119 = scalar_select %p116, %s117, %s118
      %p122 = pneg %p116
      %p123 = scmp.eq.s32.totalorder %s18, 1
      %p124 = por %p122, %p123
      %p125 = scmp.ne.s32.totalorder %s117, %s120
      %p126 = scmp.eq.s32.totalorder %s18, 0
      %p127 = por %p125, %p126
      %p128 = scmp.ne.s32.totalorder %s117, %s120
      %p129 = scmp.eq.s32.totalorder %s23, 1
      %p130 = por %p128, %p129
      %p131 = scmp.ne.s32.totalorder %s120, %s121
      %p132 = scmp.eq.s32.totalorder %s23, 0
      %p133 = por %p131, %p132
      %p134 = scmp.ne.s32.totalorder %s120, %s121
      %p135 = scmp.eq.s32.totalorder %s24, 1
      %p136 = por %p134, %p135
      %p138 = scmp.ne.s32.totalorder %s121, %s137
      %p139 = scmp.eq.s32.totalorder %s24, 0
      %p140 = por %p138, %p139
      %p141 = scmp.le.s32.totalorder 1, %s18
      %p142 = scmp.lt.s32.totalorder %s18, 3
      %p143 = pnand %p141, %p142
      %p144 = pneg %p143
      // Predicated region
      $region9: #{tpu_custom_call.1} parent=5 // pred_check
        _
      $region10: #{tpu_custom_call.1} parent=5 // pred_check_branch
        %146 = sbr.rel (%p143) target = $region12
      $region11: #{tpu_custom_call.1} parent=5 // pred_region
        %s147 = ssub.s32 %s18, 1
        // Predicated region
        $region13: #{tpu_custom_call.1} parent=11 // pred_check
          %p148 = pneg %p65
        $region14: #{tpu_custom_call.1} parent=11 // pred_check_branch
          %150 = sbr.rel (%p148) target = $region16
        $region15: #{tpu_custom_call.1} parent=11 // pred_region
          %s152 = ssub.s32 768, 768
          %153 = vsyncadd [#allocation6], %s152
          %s154 = sshll.u32 [#allocation5], 4
          %s155 = int_to_ptr.vmem [resolvable:$true] %s154
          %160 = dma.hbm_to_vmem [thread:$0]  %s1, 768, %s155, [#allocation6], 256, 256, 16
        $region16: #{tpu_custom_call.1} parent=11 // pred_fallthru
          _
        // Predicated region
        $region17: #{tpu_custom_call.1} parent=11 // pred_check
          %p161 = pneg %p86
        $region18: #{tpu_custom_call.1} parent=11 // pred_check_branch
          %163 = sbr.rel (%p161) target = $region20
        $region19: #{tpu_custom_call.1} parent=11 // pred_region
          %s165 = ssub.s32 4096, 4096
          %166 = vsyncadd [#allocation6], %s165
          %s167 = sshll.u32 [#allocation7], 4
          %s168 = int_to_ptr.vmem [resolvable:$true] %s167
          %173 = dma.hbm_to_vmem [thread:$0]  %s2, 4096, %s168, [#allocation6], 128, 128, 8
        $region20: #{tpu_custom_call.1} parent=11 // pred_fallthru
          _
        // Predicated region
        $region21: #{tpu_custom_call.1} parent=11 // pred_check
          %p174 = pneg %p107
        $region22: #{tpu_custom_call.1} parent=11 // pred_check_branch
          %176 = sbr.rel (%p174) target = $region24
        $region23: #{tpu_custom_call.1} parent=11 // pred_region
          %s178 = ssub.s32 4096, 4096
          %179 = vsyncadd [#allocation9], %s178
          %s180 = sshll.u32 [#allocation8], 4
          %s181 = int_to_ptr.vmem [resolvable:$true] %s180
          %186 = dma.hbm_to_vmem [thread:$0]  %s3, 4096, %s181, [#allocation9], 128, 128, 8
        $region24: #{tpu_custom_call.1} parent=11 // pred_fallthru
          _
      $region12: #{tpu_custom_call.1} parent=5 // pred_fallthru
        _
      %p187 = scmp.lt.s32.totalorder %s18, 2
      // Predicated region
      $region25: #{tpu_custom_call.1} parent=5 // pred_check
        %p188 = pneg %p187
      $region26: #{tpu_custom_call.1} parent=5 // pred_check_branch
        %190 = sbr.rel (%p188) target = $region28
      $region27: #{tpu_custom_call.1} parent=5 // pred_region
        // Predicated region
        $region29: #{tpu_custom_call.1} parent=27 // pred_check
          %p191 = pneg %p38
        $region30: #{tpu_custom_call.1} parent=27 // pred_check_branch
          %193 = sbr.rel (%p191) target = $region32
        $region31: #{tpu_custom_call.1} parent=27 // pred_region
          %s194 = sand.u32 %s28, 1
          %s195 = scalar_lea.sflag [#allocation3], %s194
          %s196 = sand.u32 %s28, 1
          %s197 = smul.addr %s196, 8
          %s198 = scalar_lea.vmem [#allocation2], %s197
          %s200 = ssub.s32 128, 128
          %201 = vsyncadd %s195, %s200
          %s202 = smul.addr %s18, 128
          %s203 = scalar_lea.hbm %s0, %s202
          %s205 = sshll.u32 %s198, 4
          %s206 = int_to_ptr.vmem [resolvable:$true] %s205
          %208 = dma.hbm_to_vmem [thread:$0]  %s203, 128, %s206, %s195
        $region32: #{tpu_custom_call.1} parent=27 // pred_fallthru
          _
      $region28: #{tpu_custom_call.1} parent=5 // pred_fallthru
        _
      %p209 = scmp.le.s32.totalorder 1, %s18
      %p210 = scmp.lt.s32.totalorder %s18, 3
      %p211 = pnand %p209, %p210
      %p212 = pneg %p211
      // Predicated region
      $region33: #{tpu_custom_call.1} parent=5 // pred_check
        _
      $region34: #{tpu_custom_call.1} parent=5 // pred_check_branch
        %214 = sbr.rel (%p211) target = $region36
      $region35: #{tpu_custom_call.1} parent=5 // pred_region
        %s215 = ssub.s32 %s18, 1
        %s216 = sand.u32 %s31, 1
        %s217 = scalar_lea.sflag [#allocation3], %s216
        %s218 = sand.u32 %s31, 1
        %s219 = smul.addr %s218, 8
        %s220 = scalar_lea.vmem [#allocation2], %s219
        // Predicated region
        $region37: #{tpu_custom_call.1} parent=35 // pred_check
          %p221 = pneg %p44
        $region38: #{tpu_custom_call.1} parent=35 // pred_check_branch
          %223 = sbr.rel (%p221) target = $region40
        $region39: #{tpu_custom_call.1} parent=35 // pred_region
          %224 = dma.done %s217, 128
        $region40: #{tpu_custom_call.1} parent=35 // pred_fallthru
          _
        // Predicated region
        $region41: #{tpu_custom_call.1} parent=35 // pred_check
          %p225 = pneg %p65
        $region42: #{tpu_custom_call.1} parent=35 // pred_check_branch
          %227 = sbr.rel (%p225) target = $region44
        $region43: #{tpu_custom_call.1} parent=35 // pred_region
          %228 = dma.done [#allocation6], 768
        $region44: #{tpu_custom_call.1} parent=35 // pred_fallthru
          _
        // Predicated region
        $region45: #{tpu_custom_call.1} parent=35 // pred_check
          %p229 = pneg %p86
        $region46: #{tpu_custom_call.1} parent=35 // pred_check_branch
          %231 = sbr.rel (%p229) target = $region48
        $region47: #{tpu_custom_call.1} parent=35 // pred_region
          %232 = dma.done [#allocation6], 4096
        $region48: #{tpu_custom_call.1} parent=35 // pred_fallthru
          _
        // Predicated region
        $region49: #{tpu_custom_call.1} parent=35 // pred_check
          %p233 = pneg %p107
        $region50: #{tpu_custom_call.1} parent=35 // pred_check_branch
          %235 = sbr.rel (%p233) target = $region52
        $region51: #{tpu_custom_call.1} parent=35 // pred_region
          %236 = dma.done [#allocation9], 4096
        $region52: #{tpu_custom_call.1} parent=35 // pred_fallthru
          _
        %s237 = sand.u32 %s31, 1
        %s238 = scalar_lea.sflag [#allocation3], %s237
        %s239 = sand.u32 %s31, 1
        %s240 = smul.addr %s239, 8
        %s241 = scalar_lea.vmem [#allocation2], %s240
        %p242 = pneg %p44
        %p243 = pneg %p41
        %p244 = pneg %p65
        %p245 = pneg %p62
        %p246 = pneg %p86
        %p247 = pneg %p83
        %p248 = pneg %p107
        %p249 = pneg %p104
        %p250 = pneg %p133
        %p251 = pneg %p130
        %s252 = sand.u32 %s120, 1
        %s253 = scalar_lea.sflag [#allocation4], %s252
        %s254 = sand.u32 %s120, 1
        %s255 = smul.addr %s254, 8
        %s256 = scalar_lea.vmem [#allocation10], %s255
        %v257 = vld [vmem:[%s220] sm:$0xff]
        %v258 = vld [vmem:[#allocation5] sm:$0xff]
        %v259 = vld [vmem:[#allocation5 + $0x8] sm:$0xff]
        %v260 = vld [vmem:[#allocation5 + $0x10] sm:$0xff]
        %v261 = vld [vmem:[#allocation5 + $0x18] sm:$0xff]
        %s262 = scalar_lea.vmem [#allocation5], 32
        %v263 = vld [vmem:[%s262] ss:$8 sm:$0x3]
        %v265 = vlaneseq
        %v266 = vshrl.u32 %v265, 7
        %v267 = vsub.s32 0, %v266
        %v268 = vrot.slane %v263, %v267
        %v269 = vlaneseq
        %v270 = vshrl.u32 %v269, 7
        %v271 = vsub.s32 1, %v270
        %v272 = vrot.slane %v263, %v271
        %vm275 = vcmask 130048
        %v277 = vsel %vm275, %v257, 0
        %279 = vmatprep.subr.mxu0 0.0
        %280 = vmatpush1.msra.mxu0 0.0
        %281 = vmatprep.subr.mxu0 0.0
        %282 = vmatpush1.msra.mxu0 0.0
        %283 = vmatprep.subr.mxu0 0.0
        %284 = vmatpush1.msra.mxu0 0.0
        %285 = vmatprep.subr.mxu0 0.0
        %286 = vmatpush1.msra.mxu0 0.0
        %287 = vmatprep.subr.mxu0 0.0
        %288 = vmatpush1.msra.mxu0 0.0
        %289 = vmatprep.subr.mxu0 0.0
        %290 = vmatpush1.msra.mxu0 0.0
        %291 = vmatprep.subr.mxu0 0.0
        %292 = vmatpush1.msra.mxu0 0.0
        %293 = vmatprep.subr.mxu0 0.0
        %294 = vmatpush1.msra.mxu0 0.0
        %295 = vmatprep.subr.mxu0 0.0
        %296 = vmatpush1.msra.mxu0 0.0
        %297 = vmatprep.subr.mxu0 0.0
        %298 = vmatpush1.msra.mxu0 0.0
        %299 = vmatprep.subr.mxu0 0.0
        %300 = vmatpush1.msra.mxu0 0.0
        %301 = vmatprep.subr.mxu0 0.0
        %302 = vmatpush1.msra.mxu0 0.0
        %303 = vmatprep.subr.mxu0 0.0
        %304 = vmatpush1.msra.mxu0 0.0
        %305 = vmatprep.subr.mxu0 0.0
        %306 = vmatpush1.msra.mxu0 0.0
        %307 = vmatprep.subr.mxu0 %v261
        %308 = vmatpush1.msra.mxu0 %v260
        %309 = vmatprep.subr.mxu0 %v259
        %310 = vmatpush1.msra.mxu0 %v258
        %311 = vmatprep.subr.mxu0 0.0
        %312 = vmatpush2.msra.mxu0 0.0
        %313 = vmatprep.subr.mxu0 0.0
        %314 = vmatpush2.msra.mxu0 0.0
        %315 = vmatprep.subr.mxu0 0.0
        %316 = vmatpush2.msra.mxu0 0.0
        %317 = vmatprep.subr.mxu0 0.0
        %318 = vmatpush2.msra.mxu0 0.0
        %319 = vmatprep.subr.mxu0 0.0
        %320 = vmatpush2.msra.mxu0 0.0
        %321 = vmatprep.subr.mxu0 0.0
        %322 = vmatpush2.msra.mxu0 0.0
        %323 = vmatprep.subr.mxu0 0.0
        %324 = vmatpush2.msra.mxu0 0.0
        %325 = vmatprep.subr.mxu0 0.0
        %326 = vmatpush2.msra.mxu0 0.0
        %327 = vmatprep.subr.mxu0 0.0
        %328 = vmatpush2.msra.mxu0 0.0
        %329 = vmatprep.subr.mxu0 0.0
        %330 = vmatpush2.msra.mxu0 0.0
        %331 = vmatprep.subr.mxu0 0.0
        %332 = vmatpush2.msra.mxu0 0.0
        %333 = vmatprep.subr.mxu0 0.0
        %334 = vmatpush2.msra.mxu0 0.0
        %335 = vmatprep.subr.mxu0 0.0
        %336 = vmatpush2.msra.mxu0 0.0
        %337 = vmatprep.subr.mxu0 0.0
        %338 = vmatpush2.msra.mxu0 0.0
        %339 = vmatprep.subr.mxu0 0.0
        %340 = vmatpush2.msra.mxu0 0.0
        %341 = vmatprep.subr.mxu0 0.0
        %342 = vmatpush2.msra.mxu0 0.0
        %343 = vmatprep.mubr.f32.mxu0 0.0
        %344 = vmatmul.mubr.f32.gmra.mxu0 %v277
        %v345 = vpop.f32.mrf.mxu0
        %v346 = vadd.f32 %v268, %v345
        %v347 = vpop.f32.mrf.mxu0
        %v348 = vadd.f32 %v272, %v347
        %349 = vdwg.mxu0
        %v350 = vand.u32 2147483647, %v346
        %vm351 = vcmp.le.f32.partialorder %v350, 0.7853982
        %vm352 = vcmp.lt.s32.totalorder %v346, 0
        %v353 = vand.u32 %v346, 2139095040
        %v354 = vshrl.u32 %v353, 23
        %v355 = vsub.s32 %v354, 127
        %v356 = vand.u32 2147483647, %v346
        %v357 = vand.u32 %v356, 8388607
        %v358 = vor.u32 %v357, 8388608
        %v359 = vsub.s32 0, %v358
        %v360 = vadd.s32 %v355, 1
        %vm361 = vcmp.gt.s32.totalorder %v360, 0
        %v362 = vsel %vm361, %v360, 0
        %v363 = vshrl.u32 %v362, 5
        %v364 = vand.u32 %v362, 31
        %v365 = vsub.s32 32, %v364
        %v366 = vshrl.u32 683565275, %v365
        %v367 = vshll.u32 683565275, %v364
        %v368 = vshrl.u32 2475754826, %v365
        %v369 = vor.u32 %v367, %v368
        %v370 = vshll.u32 2475754826, %v364
        %v371 = vshrl.u32 2131351028, %v365
        %v372 = vor.u32 %v370, %v371
        %v373 = vshll.u32 2131351028, %v364
        %v374 = vshrl.u32 2102212464, %v365
        %v375 = vor.u32 %v373, %v374
        %v376 = vshll.u32 2102212464, %v364
        %v377 = vshrl.u32 920167782, %v365
        %v378 = vor.u32 %v376, %v377
        %v379 = vshll.u32 920167782, %v364
        %v380 = vshrl.u32 1326507024, %v365
        %v381 = vor.u32 %v379, %v380
        %vm382 = vcmp.lt.s32.totalorder %v363, 1
        %vm383 = vcmp.lt.s32.totalorder %v363, 2
        %vm384 = vcmp.lt.s32.totalorder %v363, 3
        %vm385 = vcmp.lt.s32.totalorder %v363, 4
        %v386 = vsel %vm382, %v366, %v369
        %v387 = vsel %vm385, %v375, 2102212464
        %v388 = vsel %vm384, %v372, %v387
        %v389 = vsel %vm383, %v386, %v388
        %v390 = vsel %vm382, %v369, %v372
        %v391 = vsel %vm385, %v378, 920167782
        %v392 = vsel %vm384, %v375, %v391
        %v393 = vsel %vm383, %v390, %v392
        %v394 = vsel %vm382, %v372, %v375
        %v395 = vsel %vm385, %v381, 1326507024
        %v396 = vsel %vm384, %v378, %v395
        %v397 = vsel %vm383, %v394, %v396
        %v398 = vshll.u32 %v358, 8
        %v399 = vmul.u32.u64.compose %v398, %v397
        %v400 = vextract.low.u32 %v399
        %v401 = vextract.high.u32 %v399
        %v402 = vmul.u32.u64.compose %v398, %v393
        %v403 = vextract.low.u32 %v402
        %v404 = vextract.high.u32 %v402
        %v405 = vmul.u32 %v398, %v389
        %v406 = vadd.s32 %v401, %v403
        %vm407 = vc.u32 %v401, %v403
        %v408 = vadd.s32 %v404, 1
        %v409 = vsel %vm407, %v408, %v404
        %v410 = vadd.s32 %v405, %v409
        %v411 = vadd.s32 %v410, 536870912
        %v412 = vshrl.u32 %v411, 30
        %v413 = vshll.u32 %v412, 30
        %v414 = vsub.s32 %v410, %v413
        %vm415 = vcmp.lt.s32.totalorder %v414, 0
        %v416 = vsub.s32 0, %v414
        %v417 = vsel %vm415, %v416, %v414
        %v418 = vclz %v417
        %v419 = vsub.s32 %v418, 2
        %vm420 = vcmp.gt.s32.totalorder 0, %v419
        %v421 = vsel %vm420, 0, %v419
        %v422 = vsub.s32 32, %v421
        %v423 = vshll.u32 %v414, %v421
        %v424 = vshrl.u32 %v406, %v422
        %v425 = vor.u32 %v423, %v424
        %v426 = vsub.s32 4294967266, %v421
        %v427 = vadd.s32 %v426, 127
        %v428 = vshll.u32 %v427, 23
        %v429 = vor.u32 4788187, %v428
        %v430 = vand.u32 2147483647, %v429
        %v432 = vcvt.s32.f32 %v425
        %v433 = vmul.f32 %v432, %v430
        %v434 = vxor.u32 %v433, 2147483648
        %v435 = vsel %vm352, %v434, %v433
        %v436 = vsub.s32 4, %v412
        %v437 = vsel %vm352, %v436, %v412
        %v438 = vsel %vm351, %v346, %v435
        %v439 = vsel %vm351, 0, %v437
        %v440 = vcosq.f32.pop %v438
        %v441 = vsinq.f32.pop %v438
        %vm442 = vweird.f32 %v346
        %v443 = vadd.s32 %v439, 3
        %v444 = vand.u32 %v443, 3
        %vm445 = vcmp.lt.s32.totalorder %v444, 2
        %vm446 = vcmp.eq.s32.totalorder %v444, 0
        %v447 = vxor.u32 %v441, 2147483648
        %v448 = vsel %vm446, %v440, %v447
        %vm449 = vcmp.eq.s32.totalorder %v444, 2
        %v450 = vxor.u32 %v440, 2147483648
        %v451 = vsel %vm449, %v450, %v441
        %v452 = vsel %vm445, %v448, %v451
        %v453 = vsel %vm442, nan, %v452
        %v454 = vand.u32 2147483647, %v348
        %vm455 = vcmp.le.f32.partialorder %v454, 0.7853982
        %vm456 = vcmp.lt.s32.totalorder %v348, 0
        %v457 = vand.u32 %v348, 2139095040
        %v458 = vshrl.u32 %v457, 23
        %v459 = vsub.s32 %v458, 127
        %v460 = vand.u32 2147483647, %v348
        %v461 = vand.u32 %v460, 8388607
        %v462 = vor.u32 %v461, 8388608
        %v463 = vsub.s32 0, %v462
        %v464 = vadd.s32 %v459, 1
        %vm465 = vcmp.gt.s32.totalorder %v464, 0
        %v466 = vsel %vm465, %v464, 0
        %v467 = vshrl.u32 %v466, 5
        %v468 = vand.u32 %v466, 31
        %v469 = vsub.s32 32, %v468
        %v470 = vshrl.u32 683565275, %v469
        %v471 = vshll.u32 683565275, %v468
        %v472 = vshrl.u32 2475754826, %v469
        %v473 = vor.u32 %v471, %v472
        %v474 = vshll.u32 2475754826, %v468
        %v475 = vshrl.u32 2131351028, %v469
        %v476 = vor.u32 %v474, %v475
        %v477 = vshll.u32 2131351028, %v468
        %v478 = vshrl.u32 2102212464, %v469
        %v479 = vor.u32 %v477, %v478
        %v480 = vshll.u32 2102212464, %v468
        %v481 = vshrl.u32 920167782, %v469
        %v482 = vor.u32 %v480, %v481
        %v483 = vshll.u32 920167782, %v468
        %v484 = vshrl.u32 1326507024, %v469
        %v485 = vor.u32 %v483, %v484
        %vm486 = vcmp.lt.s32.totalorder %v467, 1
        %vm487 = vcmp.lt.s32.totalorder %v467, 2
        %vm488 = vcmp.lt.s32.totalorder %v467, 3
        %vm489 = vcmp.lt.s32.totalorder %v467, 4
        %v490 = vsel %vm486, %v470, %v473
        %v491 = vsel %vm489, %v479, 2102212464
        %v492 = vsel %vm488, %v476, %v491
        %v493 = vsel %vm487, %v490, %v492
        %v494 = vsel %vm486, %v473, %v476
        %v495 = vsel %vm489, %v482, 920167782
        %v496 = vsel %vm488, %v479, %v495
        %v497 = vsel %vm487, %v494, %v496
        %v498 = vsel %vm486, %v476, %v479
        %v499 = vsel %vm489, %v485, 1326507024
        %v500 = vsel %vm488, %v482, %v499
        %v501 = vsel %vm487, %v498, %v500
        %v502 = vshll.u32 %v462, 8
        %v503 = vmul.u32.u64.compose %v502, %v501
        %v504 = vextract.low.u32 %v503
        %v505 = vextract.high.u32 %v503
        %v506 = vmul.u32.u64.compose %v502, %v497
        %v507 = vextract.low.u32 %v506
        %v508 = vextract.high.u32 %v506
        %v509 = vmul.u32 %v502, %v493
        %v510 = vadd.s32 %v505, %v507
        %vm511 = vc.u32 %v505, %v507
        %v512 = vadd.s32 %v508, 1
        %v513 = vsel %vm511, %v512, %v508
        %v514 = vadd.s32 %v509, %v513
        %v515 = vadd.s32 %v514, 536870912
        %v516 = vshrl.u32 %v515, 30
        %v517 = vshll.u32 %v516, 30
        %v518 = vsub.s32 %v514, %v517
        %vm519 = vcmp.lt.s32.totalorder %v518, 0
        %v520 = vsub.s32 0, %v518
        %v521 = vsel %vm519, %v520, %v518
        %v522 = vclz %v521
        %v523 = vsub.s32 %v522, 2
        %vm524 = vcmp.gt.s32.totalorder 0, %v523
        %v525 = vsel %vm524, 0, %v523
        %v526 = vsub.s32 32, %v525
        %v527 = vshll.u32 %v518, %v525
        %v528 = vshrl.u32 %v510, %v526
        %v529 = vor.u32 %v527, %v528
        %v530 = vsub.s32 4294967266, %v525
        %v531 = vadd.s32 %v530, 127
        %v532 = vshll.u32 %v531, 23
        %v533 = vor.u32 4788187, %v532
        %v534 = vand.u32 2147483647, %v533
        %v536 = vcvt.s32.f32 %v529
        %v537 = vmul.f32 %v536, %v534
        %v538 = vxor.u32 %v537, 2147483648
        %v539 = vsel %vm456, %v538, %v537
        %v540 = vsub.s32 4, %v516
        %v541 = vsel %vm456, %v540, %v516
        %v542 = vsel %vm455, %v348, %v539
        %v543 = vsel %vm455, 0, %v541
        %v544 = vcosq.f32.pop %v542
        %v545 = vsinq.f32.pop %v542
        %vm546 = vweird.f32 %v348
        %v547 = vadd.s32 %v543, 3
        %v548 = vand.u32 %v547, 3
        %vm549 = vcmp.lt.s32.totalorder %v548, 2
        %vm550 = vcmp.eq.s32.totalorder %v548, 0
        %v551 = vxor.u32 %v545, 2147483648
        %v552 = vsel %vm550, %v544, %v551
        %vm553 = vcmp.eq.s32.totalorder %v548, 2
        %v554 = vxor.u32 %v544, 2147483648
        %v555 = vsel %vm553, %v554, %v545
        %v556 = vsel %vm549, %v552, %v555
        %v557 = vsel %vm546, nan, %v556
        %v558 = vld [vmem:[#allocation7] sm:$0xff]
        %v559 = vld [vmem:[#allocation7 + $0x8] sm:$0xff]
        %v560 = vld [vmem:[#allocation7 + $0x10] sm:$0xff]
        %v561 = vld [vmem:[#allocation7 + $0x18] sm:$0xff]
        %v562 = vld [vmem:[#allocation7 + $0x20] sm:$0xff]
        %v563 = vld [vmem:[#allocation7 + $0x28] sm:$0xff]
        %v564 = vld [vmem:[#allocation7 + $0x30] sm:$0xff]
        %v565 = vld [vmem:[#allocation7 + $0x38] sm:$0xff]
        %v566 = vld [vmem:[#allocation7 + $0x40] sm:$0xff]
        %v567 = vld [vmem:[#allocation7 + $0x48] sm:$0xff]
        %v568 = vld [vmem:[#allocation7 + $0x50] sm:$0xff]
        %v569 = vld [vmem:[#allocation7 + $0x58] sm:$0xff]
        %v570 = vld [vmem:[#allocation7 + $0x60] sm:$0xff]
        %v571 = vld [vmem:[#allocation7 + $0x68] sm:$0xff]
        %v572 = vld [vmem:[#allocation7 + $0x70] sm:$0xff]
        %v573 = vld [vmem:[#allocation7 + $0x78] sm:$0xff]
        %v574 = vld [vmem:[#allocation7 + $0x80] sm:$0xff]
        %v575 = vld [vmem:[#allocation7 + $0x88] sm:$0xff]
        %v576 = vld [vmem:[#allocation7 + $0x90] sm:$0xff]
        %v577 = vld [vmem:[#allocation7 + $0x98] sm:$0xff]
        %v578 = vld [vmem:[#allocation7 + $0xa0] sm:$0xff]
        %v579 = vld [vmem:[#allocation7 + $0xa8] sm:$0xff]
        %v580 = vld [vmem:[#allocation7 + $0xb0] sm:$0xff]
        %v581 = vld [vmem:[#allocation7 + $0xb8] sm:$0xff]
        %v582 = vld [vmem:[#allocation7 + $0xc0] sm:$0xff]
        %v583 = vld [vmem:[#allocation7 + $0xc8] sm:$0xff]
        %v584 = vld [vmem:[#allocation7 + $0xd0] sm:$0xff]
        %v585 = vld [vmem:[#allocation7 + $0xd8] sm:$0xff]
        %v586 = vld [vmem:[#allocation7 + $0xe0] sm:$0xff]
        %v587 = vld [vmem:[#allocation7 + $0xe8] sm:$0xff]
        %v588 = vld [vmem:[#allocation7 + $0xf0] sm:$0xff]
        %v589 = vld [vmem:[#allocation7 + $0xf8] sm:$0xff]
        %v590 = vand.u32 2147483647, %v346
        %vm591 = vcmp.le.f32.partialorder %v590, 0.7853982
        %vm592 = vcmp.lt.s32.totalorder %v346, 0
        %v593 = vand.u32 %v346, 2139095040
        %v594 = vshrl.u32 %v593, 23
        %v595 = vsub.s32 %v594, 127
        %v596 = vand.u32 2147483647, %v346
        %v597 = vand.u32 %v596, 8388607
        %v598 = vor.u32 %v597, 8388608
        %v599 = vsub.s32 0, %v598
        %v600 = vadd.s32 %v595, 1
        %vm601 = vcmp.gt.s32.totalorder %v600, 0
        %v602 = vsel %vm601, %v600, 0
        %v603 = vshrl.u32 %v602, 5
        %v604 = vand.u32 %v602, 31
        %v605 = vsub.s32 32, %v604
        %v606 = vshrl.u32 683565275, %v605
        %v607 = vshll.u32 683565275, %v604
        %v608 = vshrl.u32 2475754826, %v605
        %v609 = vor.u32 %v607, %v608
        %v610 = vshll.u32 2475754826, %v604
        %v611 = vshrl.u32 2131351028, %v605
        %v612 = vor.u32 %v610, %v611
        %v613 = vshll.u32 2131351028, %v604
        %v614 = vshrl.u32 2102212464, %v605
        %v615 = vor.u32 %v613, %v614
        %v616 = vshll.u32 2102212464, %v604
        %v617 = vshrl.u32 920167782, %v605
        %v618 = vor.u32 %v616, %v617
        %v619 = vshll.u32 920167782, %v604
        %v620 = vshrl.u32 1326507024, %v605
        %v621 = vor.u32 %v619, %v620
        %vm622 = vcmp.lt.s32.totalorder %v603, 1
        %vm623 = vcmp.lt.s32.totalorder %v603, 2
        %vm624 = vcmp.lt.s32.totalorder %v603, 3
        %vm625 = vcmp.lt.s32.totalorder %v603, 4
        %v626 = vsel %vm622, %v606, %v609
        %v627 = vsel %vm625, %v615, 2102212464
        %v628 = vsel %vm624, %v612, %v627
        %v629 = vsel %vm623, %v626, %v628
        %v630 = vsel %vm622, %v609, %v612
        %v631 = vsel %vm625, %v618, 920167782
        %v632 = vsel %vm624, %v615, %v631
        %v633 = vsel %vm623, %v630, %v632
        %v634 = vsel %vm622, %v612, %v615
        %v635 = vsel %vm625, %v621, 1326507024
        %v636 = vsel %vm624, %v618, %v635
        %v637 = vsel %vm623, %v634, %v636
        %v638 = vshll.u32 %v598, 8
        %v639 = vmul.u32.u64.compose %v638, %v637
        %v640 = vextract.low.u32 %v639
        %v641 = vextract.high.u32 %v639
        %v642 = vmul.u32.u64.compose %v638, %v633
        %v643 = vextract.low.u32 %v642
        %v644 = vextract.high.u32 %v642
        %v645 = vmul.u32 %v638, %v629
        %v646 = vadd.s32 %v641, %v643
        %vm647 = vc.u32 %v641, %v643
        %v648 = vadd.s32 %v644, 1
        %v649 = vsel %vm647, %v648, %v644
        %v650 = vadd.s32 %v645, %v649
        %v651 = vadd.s32 %v650, 536870912
        %v652 = vshrl.u32 %v651, 30
        %v653 = vshll.u32 %v652, 30
        %v654 = vsub.s32 %v650, %v653
        %vm655 = vcmp.lt.s32.totalorder %v654, 0
        %v656 = vsub.s32 0, %v654
        %v657 = vsel %vm655, %v656, %v654
        %v658 = vclz %v657
        %v659 = vsub.s32 %v658, 2
        %vm660 = vcmp.gt.s32.totalorder 0, %v659
        %v661 = vsel %vm660, 0, %v659
        %v662 = vsub.s32 32, %v661
        %v663 = vshll.u32 %v654, %v661
        %v664 = vshrl.u32 %v646, %v662
        %v665 = vor.u32 %v663, %v664
        %v666 = vsub.s32 4294967266, %v661
        %v667 = vadd.s32 %v666, 127
        %v668 = vshll.u32 %v667, 23
        %v669 = vor.u32 4788187, %v668
        %v670 = vand.u32 2147483647, %v669
        %v672 = vcvt.s32.f32 %v665
        %v673 = vmul.f32 %v672, %v670
        %v674 = vxor.u32 %v673, 2147483648
        %v675 = vsel %vm592, %v674, %v673
        %v676 = vsub.s32 4, %v652
        %v677 = vsel %vm592, %v676, %v652
        %v678 = vsel %vm591, %v346, %v675
        %v679 = vsel %vm591, 0, %v677
        %v680 = vcosq.f32.pop %v678
        %v681 = vsinq.f32.pop %v678
        %vm682 = vweird.f32 %v346
        %v683 = vand.u32 %v679, 3
        %vm684 = vcmp.lt.s32.totalorder %v683, 2
        %vm685 = vcmp.eq.s32.totalorder %v683, 0
        %v686 = vxor.u32 %v681, 2147483648
        %v687 = vsel %vm685, %v680, %v686
        %vm688 = vcmp.eq.s32.totalorder %v683, 2
        %v689 = vxor.u32 %v680, 2147483648
        %v690 = vsel %vm688, %v689, %v681
        %v691 = vsel %vm684, %v687, %v690
        %v692 = vsel %vm682, nan, %v691
        %v693 = vand.u32 2147483647, %v348
        %vm694 = vcmp.le.f32.partialorder %v693, 0.7853982
        %vm695 = vcmp.lt.s32.totalorder %v348, 0
        %v696 = vand.u32 %v348, 2139095040
        %v697 = vshrl.u32 %v696, 23
        %v698 = vsub.s32 %v697, 127
        %v699 = vand.u32 2147483647, %v348
        %v700 = vand.u32 %v699, 8388607
        %v701 = vor.u32 %v700, 8388608
        %v702 = vsub.s32 0, %v701
        %v703 = vadd.s32 %v698, 1
        %vm704 = vcmp.gt.s32.totalorder %v703, 0
        %v705 = vsel %vm704, %v703, 0
        %v706 = vshrl.u32 %v705, 5
        %v707 = vand.u32 %v705, 31
        %v708 = vsub.s32 32, %v707
        %v709 = vshrl.u32 683565275, %v708
        %v710 = vshll.u32 683565275, %v707
        %v711 = vshrl.u32 2475754826, %v708
        %v712 = vor.u32 %v710, %v711
        %v713 = vshll.u32 2475754826, %v707
        %v714 = vshrl.u32 2131351028, %v708
        %v715 = vor.u32 %v713, %v714
        %v716 = vshll.u32 2131351028, %v707
        %v717 = vshrl.u32 2102212464, %v708
        %v718 = vor.u32 %v716, %v717
        %v719 = vshll.u32 2102212464, %v707
        %v720 = vshrl.u32 920167782, %v708
        %v721 = vor.u32 %v719, %v720
        %v722 = vshll.u32 920167782, %v707
        %v723 = vshrl.u32 1326507024, %v708
        %v724 = vor.u32 %v722, %v723
        %vm725 = vcmp.lt.s32.totalorder %v706, 1
        %vm726 = vcmp.lt.s32.totalorder %v706, 2
        %vm727 = vcmp.lt.s32.totalorder %v706, 3
        %vm728 = vcmp.lt.s32.totalorder %v706, 4
        %v729 = vsel %vm725, %v709, %v712
        %v730 = vsel %vm728, %v718, 2102212464
        %v731 = vsel %vm727, %v715, %v730
        %v732 = vsel %vm726, %v729, %v731
        %v733 = vsel %vm725, %v712, %v715
        %v734 = vsel %vm728, %v721, 920167782
        %v735 = vsel %vm727, %v718, %v734
        %v736 = vsel %vm726, %v733, %v735
        %v737 = vsel %vm725, %v715, %v718
        %v738 = vsel %vm728, %v724, 1326507024
        %v739 = vsel %vm727, %v721, %v738
        %v740 = vsel %vm726, %v737, %v739
        %v741 = vshll.u32 %v701, 8
        %v742 = vmul.u32.u64.compose %v741, %v740
        %v743 = vextract.low.u32 %v742
        %v744 = vextract.high.u32 %v742
        %v745 = vmul.u32.u64.compose %v741, %v736
        %v746 = vextract.low.u32 %v745
        %v747 = vextract.high.u32 %v745
        %v748 = vmul.u32 %v741, %v732
        %v749 = vadd.s32 %v744, %v746
        %vm750 = vc.u32 %v744, %v746
        %v751 = vadd.s32 %v747, 1
        %v752 = vsel %vm750, %v751, %v747
        %v753 = vadd.s32 %v748, %v752
        %v754 = vadd.s32 %v753, 536870912
        %v755 = vshrl.u32 %v754, 30
        %v756 = vshll.u32 %v755, 30
        %v757 = vsub.s32 %v753, %v756
        %vm758 = vcmp.lt.s32.totalorder %v757, 0
        %v759 = vsub.s32 0, %v757
        %v760 = vsel %vm758, %v759, %v757
        %v761 = vclz %v760
        %v762 = vsub.s32 %v761, 2
        %vm763 = vcmp.gt.s32.totalorder 0, %v762
        %v764 = vsel %vm763, 0, %v762
        %v765 = vsub.s32 32, %v764
        %v766 = vshll.u32 %v757, %v764
        %v767 = vshrl.u32 %v749, %v765
        %v768 = vor.u32 %v766, %v767
        %v769 = vsub.s32 4294967266, %v764
        %v770 = vadd.s32 %v769, 127
        %v771 = vshll.u32 %v770, 23
        %v772 = vor.u32 4788187, %v771
        %v773 = vand.u32 2147483647, %v772
        %v775 = vcvt.s32.f32 %v768
        %v776 = vmul.f32 %v775, %v773
        %v777 = vxor.u32 %v776, 2147483648
        %v778 = vsel %vm695, %v777, %v776
        %v779 = vsub.s32 4, %v755
        %v780 = vsel %vm695, %v779, %v755
        %v781 = vsel %vm694, %v348, %v778
        %v782 = vsel %vm694, 0, %v780
        %v783 = vcosq.f32.pop %v781
        %v784 = vsinq.f32.pop %v781
        %vm785 = vweird.f32 %v348
        %v786 = vand.u32 %v782, 3
        %vm787 = vcmp.lt.s32.totalorder %v786, 2
        %vm788 = vcmp.eq.s32.totalorder %v786, 0
        %v789 = vxor.u32 %v784, 2147483648
        %v790 = vsel %vm788, %v783, %v789
        %vm791 = vcmp.eq.s32.totalorder %v786, 2
        %v792 = vxor.u32 %v783, 2147483648
        %v793 = vsel %vm791, %v792, %v784
        %v794 = vsel %vm787, %v790, %v793
        %v795 = vsel %vm785, nan, %v794
        %v796 = vld [vmem:[#allocation8] sm:$0xff]
        %v797 = vld [vmem:[#allocation8 + $0x8] sm:$0xff]
        %v798 = vld [vmem:[#allocation8 + $0x10] sm:$0xff]
        %v799 = vld [vmem:[#allocation8 + $0x18] sm:$0xff]
        %v800 = vld [vmem:[#allocation8 + $0x20] sm:$0xff]
        %v801 = vld [vmem:[#allocation8 + $0x28] sm:$0xff]
        %v802 = vld [vmem:[#allocation8 + $0x30] sm:$0xff]
        %v803 = vld [vmem:[#allocation8 + $0x38] sm:$0xff]
        %v804 = vld [vmem:[#allocation8 + $0x40] sm:$0xff]
        %v805 = vld [vmem:[#allocation8 + $0x48] sm:$0xff]
        %v806 = vld [vmem:[#allocation8 + $0x50] sm:$0xff]
        %v807 = vld [vmem:[#allocation8 + $0x58] sm:$0xff]
        %v808 = vld [vmem:[#allocation8 + $0x60] sm:$0xff]
        %v809 = vld [vmem:[#allocation8 + $0x68] sm:$0xff]
        %v810 = vld [vmem:[#allocation8 + $0x70] sm:$0xff]
        %v811 = vld [vmem:[#allocation8 + $0x78] sm:$0xff]
        %v812 = vld [vmem:[#allocation8 + $0x80] sm:$0xff]
        %v813 = vld [vmem:[#allocation8 + $0x88] sm:$0xff]
        %v814 = vld [vmem:[#allocation8 + $0x90] sm:$0xff]
        %v815 = vld [vmem:[#allocation8 + $0x98] sm:$0xff]
        %v816 = vld [vmem:[#allocation8 + $0xa0] sm:$0xff]
        %v817 = vld [vmem:[#allocation8 + $0xa8] sm:$0xff]
        %v818 = vld [vmem:[#allocation8 + $0xb0] sm:$0xff]
        %v819 = vld [vmem:[#allocation8 + $0xb8] sm:$0xff]
        %v820 = vld [vmem:[#allocation8 + $0xc0] sm:$0xff]
        %v821 = vld [vmem:[#allocation8 + $0xc8] sm:$0xff]
        %v822 = vld [vmem:[#allocation8 + $0xd0] sm:$0xff]
        %v823 = vld [vmem:[#allocation8 + $0xd8] sm:$0xff]
        %v824 = vld [vmem:[#allocation8 + $0xe0] sm:$0xff]
        %v825 = vld [vmem:[#allocation8 + $0xe8] sm:$0xff]
        %v826 = vld [vmem:[#allocation8 + $0xf0] sm:$0xff]
        %v827 = vld [vmem:[#allocation8 + $0xf8] sm:$0xff]
        %828 = vmatprep.subr.mxu0 0.0
        %829 = vmatpush1.msra.mxu0 %v811
        %830 = vmatprep.subr.mxu0 0.0
        %831 = vmatpush1.msra.mxu0 %v810
        %832 = vmatprep.subr.mxu0 0.0
        %833 = vmatpush1.msra.mxu0 %v809
        %834 = vmatprep.subr.mxu0 0.0
        %835 = vmatpush1.msra.mxu0 %v808
        %836 = vmatprep.subr.mxu0 0.0
        %837 = vmatpush1.msra.mxu0 %v807
        %838 = vmatprep.subr.mxu0 0.0
        %839 = vmatpush1.msra.mxu0 %v806
        %840 = vmatprep.subr.mxu0 0.0
        %841 = vmatpush1.msra.mxu0 %v805
        %842 = vmatprep.subr.mxu0 0.0
        %843 = vmatpush1.msra.mxu0 %v804
        %844 = vmatprep.subr.mxu0 0.0
        %845 = vmatpush1.msra.mxu0 %v803
        %846 = vmatprep.subr.mxu0 0.0
        %847 = vmatpush1.msra.mxu0 %v802
        %848 = vmatprep.subr.mxu0 0.0
        %849 = vmatpush1.msra.mxu0 %v801
        %850 = vmatprep.subr.mxu0 0.0
        %851 = vmatpush1.msra.mxu0 %v800
        %852 = vmatprep.subr.mxu0 0.0
        %853 = vmatpush1.msra.mxu0 %v799
        %854 = vmatprep.subr.mxu0 0.0
        %855 = vmatpush1.msra.mxu0 %v798
        %856 = vmatprep.subr.mxu0 0.0
        %857 = vmatpush1.msra.mxu0 %v797
        %858 = vmatprep.subr.mxu0 0.0
        %859 = vmatpush1.msra.mxu0 %v796
        %860 = vmatprep.subr.mxu0 0.0
        %861 = vmatpush2.msra.mxu0 %v827
        %862 = vmatprep.subr.mxu0 0.0
        %863 = vmatpush2.msra.mxu0 %v826
        %864 = vmatprep.subr.mxu0 0.0
        %865 = vmatpush2.msra.mxu0 %v825
        %866 = vmatprep.subr.mxu0 0.0
        %867 = vmatpush2.msra.mxu0 %v824
        %868 = vmatprep.subr.mxu0 0.0
        %869 = vmatpush2.msra.mxu0 %v823
        %870 = vmatprep.subr.mxu0 0.0
        %871 = vmatpush2.msra.mxu0 %v822
        %872 = vmatprep.subr.mxu0 0.0
        %873 = vmatpush2.msra.mxu0 %v821
        %874 = vmatprep.subr.mxu0 0.0
        %875 = vmatpush2.msra.mxu0 %v820
        %876 = vmatprep.subr.mxu0 0.0
        %877 = vmatpush2.msra.mxu0 %v819
        %878 = vmatprep.subr.mxu0 0.0
        %879 = vmatpush2.msra.mxu0 %v818
        %880 = vmatprep.subr.mxu0 0.0
        %881 = vmatpush2.msra.mxu0 %v817
        %882 = vmatprep.subr.mxu0 0.0
        %883 = vmatpush2.msra.mxu0 %v816
        %884 = vmatprep.subr.mxu0 0.0
        %885 = vmatpush2.msra.mxu0 %v815
        %886 = vmatprep.subr.mxu0 0.0
        %887 = vmatpush2.msra.mxu0 %v814
        %888 = vmatprep.subr.mxu0 0.0
        %889 = vmatpush2.msra.mxu0 %v813
        %890 = vmatprep.subr.mxu0 0.0
        %891 = vmatpush2.msra.mxu0 %v812
        %892 = vmatprep.mubr.f32.mxu0 %v795
        %893 = vmatmul.mubr.f32.gmra.mxu0 %v692
        %v894 = vpop.f32.mrf.mxu0
        %v895 = vadd.f32 0.0, %v894
        %v896 = vpop.f32.mrf.mxu0
        %897 = vdwg.mxu0
        %898 = vmatprep.subr.mxu0 0.0
        %899 = vmatpush1.msra.mxu0 %v573
        %900 = vmatprep.subr.mxu0 0.0
        %901 = vmatpush1.msra.mxu0 %v572
        %902 = vmatprep.subr.mxu0 0.0
        %903 = vmatpush1.msra.mxu0 %v571
        %904 = vmatprep.subr.mxu0 0.0
        %905 = vmatpush1.msra.mxu0 %v570
        %906 = vmatprep.subr.mxu0 0.0
        %907 = vmatpush1.msra.mxu0 %v569
        %908 = vmatprep.subr.mxu0 0.0
        %909 = vmatpush1.msra.mxu0 %v568
        %910 = vmatprep.subr.mxu0 0.0
        %911 = vmatpush1.msra.mxu0 %v567
        %912 = vmatprep.subr.mxu0 0.0
        %913 = vmatpush1.msra.mxu0 %v566
        %914 = vmatprep.subr.mxu0 0.0
        %915 = vmatpush1.msra.mxu0 %v565
        %916 = vmatprep.subr.mxu0 0.0
        %917 = vmatpush1.msra.mxu0 %v564
        %918 = vmatprep.subr.mxu0 0.0
        %919 = vmatpush1.msra.mxu0 %v563
        %920 = vmatprep.subr.mxu0 0.0
        %921 = vmatpush1.msra.mxu0 %v562
        %922 = vmatprep.subr.mxu0 0.0
        %923 = vmatpush1.msra.mxu0 %v561
        %924 = vmatprep.subr.mxu0 0.0
        %925 = vmatpush1.msra.mxu0 %v560
        %926 = vmatprep.subr.mxu0 0.0
        %927 = vmatpush1.msra.mxu0 %v559
        %928 = vmatprep.subr.mxu0 0.0
        %929 = vmatpush1.msra.mxu0 %v558
        %930 = vmatprep.subr.mxu0 0.0
        %931 = vmatpush2.msra.mxu0 %v589
        %932 = vmatprep.subr.mxu0 0.0
        %933 = vmatpush2.msra.mxu0 %v588
        %934 = vmatprep.subr.mxu0 0.0
        %935 = vmatpush2.msra.mxu0 %v587
        %936 = vmatprep.subr.mxu0 0.0
        %937 = vmatpush2.msra.mxu0 %v586
        %938 = vmatprep.subr.mxu0 0.0
        %939 = vmatpush2.msra.mxu0 %v585
        %940 = vmatprep.subr.mxu0 0.0
        %941 = vmatpush2.msra.mxu0 %v584
        %942 = vmatprep.subr.mxu0 0.0
        %943 = vmatpush2.msra.mxu0 %v583
        %944 = vmatprep.subr.mxu0 0.0
        %945 = vmatpush2.msra.mxu0 %v582
        %946 = vmatprep.subr.mxu0 0.0
        %947 = vmatpush2.msra.mxu0 %v581
        %948 = vmatprep.subr.mxu0 0.0
        %949 = vmatpush2.msra.mxu0 %v580
        %950 = vmatprep.subr.mxu0 0.0
        %951 = vmatpush2.msra.mxu0 %v579
        %952 = vmatprep.subr.mxu0 0.0
        %953 = vmatpush2.msra.mxu0 %v578
        %954 = vmatprep.subr.mxu0 0.0
        %955 = vmatpush2.msra.mxu0 %v577
        %956 = vmatprep.subr.mxu0 0.0
        %957 = vmatpush2.msra.mxu0 %v576
        %958 = vmatprep.subr.mxu0 0.0
        %959 = vmatpush2.msra.mxu0 %v575
        %960 = vmatprep.subr.mxu0 0.0
        %961 = vmatpush2.msra.mxu0 %v574
        %962 = vmatprep.mubr.f32.mxu0 %v557
        %963 = vmatmul.mubr.f32.gmra.mxu0 %v453
        %v964 = vpop.f32.mrf.mxu0
        %v965 = vadd.f32 %v895, %v964
        %v966 = vpop.f32.mrf.mxu0
        %967 = vdwg.mxu0
        %v968 = vld [vmem:[#allocation5 + $0x21] ss:$0 sm:$0xff]
        %v969 = vadd.f32 %v965, %v968
        %970 = vst [vmem:[%s256] sm:$0xff] %v969
        %s971 = sand.u32 %s120, 1
        %s972 = scalar_lea.sflag [#allocation4], %s971
        %s973 = sand.u32 %s120, 1
        %s974 = smul.addr %s973, 8
        %s975 = scalar_lea.vmem [#allocation10], %s974
        // Predicated region
        $region53: #{tpu_custom_call.1} parent=35 // pred_check
          %p976 = pneg %p130
        $region54: #{tpu_custom_call.1} parent=35 // pred_check_branch
          %978 = sbr.rel (%p976) target = $region56
        $region55: #{tpu_custom_call.1} parent=35 // pred_region
          %s980 = ssub.s32 128, 128
          %981 = vsyncadd %s972, %s980
          %s982 = smul.addr %s23, 128
          %s983 = scalar_lea.hbm %s4, %s982
          %s985 = sshll.u32 %s975, 4
          %s986 = int_to_ptr.vmem [resolvable:$true] %s985
          %988 = dma.vmem_to_hbm [thread:$0]  %s986, 128, %s983, %s972
        $region56: #{tpu_custom_call.1} parent=35 // pred_fallthru
          _
      $region36: #{tpu_custom_call.1} parent=5 // pred_fallthru
        _
      %p989 = scmp.le.s32.totalorder 2, %s18
      // Predicated region
      $region57: #{tpu_custom_call.1} parent=5 // pred_check
        %p990 = pneg %p989
      $region58: #{tpu_custom_call.1} parent=5 // pred_check_branch
        %992 = sbr.rel (%p990) target = $region60
      $region59: #{tpu_custom_call.1} parent=5 // pred_region
        %s993 = ssub.s32 %s18, 2
        // Predicated region
        $region61: #{tpu_custom_call.1} parent=59 // pred_check
          %p994 = pneg %p136
        $region62: #{tpu_custom_call.1} parent=59 // pred_check_branch
          %996 = sbr.rel (%p994) target = $region64
        $region63: #{tpu_custom_call.1} parent=59 // pred_region
          %s997 = sand.u32 %s121, 1
          %s998 = scalar_lea.sflag [#allocation4], %s997
          %s999 = sand.u32 %s121, 1
          %s1000 = smul.addr %s999, 8
          %s1001 = scalar_lea.vmem [#allocation10], %s1000
          %1002 = dma.done %s998, 128
        $region64: #{tpu_custom_call.1} parent=59 // pred_fallthru
          _
      $region60: #{tpu_custom_call.1} parent=5 // pred_fallthru
        _
    $region6: #{tpu_custom_call.1} parent=1 // loop_footer
      %s22 = sadd.s32 1, %s18
    $region7: #{tpu_custom_call.1} parent=1 // loop_footer_branch
      %17 = sbr.rel target = $region3
    $region8: #{tpu_custom_call.1} parent=1 // loop_exit
      _
    %1003 = vsyncpa [#allocation3], 1
    %s1004 = scalar_lea.sflag [#allocation3], 1
    %1005 = vsyncpa %s1004, 1
    %1006 = vsyncpa [#allocation6], 1
    %1007 = vsyncpa [#allocation9], 1
    %1008 = vsyncpa [#allocation4], 1
    %s1009 = scalar_lea.sflag [#allocation4], 1
    %1010 = vsyncpa %s1009, 1

</llo_original>
